<compile_context>
chip_gen: v7x
topology: tpu7x:2x2x1
jax: 0.10.0
libtpu: 0.0.40
codegen_flags: <defaults>
</compile_context>

<pallas_src>
import functools

import jax
import jax.numpy as jnp
import numpy as np
from jax import lax
from jax.experimental import pallas as pl
from jax.experimental.pallas import tpu as pltpu

LANE = 128
_ROW_TILE = 2048            # 2048 rows x 128 lanes x f32 = 1 MiB per block
_FUSE_MAX_BYTES = 2 << 20   # fuse both passes when the PSD fits easily in VMEM


def _valid_mask(shape, row0, full_rows, rem):
    """Validity mask for a (R, LANE) tile whose first global row is row0."""
    row_ids = row0 + lax.broadcasted_iota(jnp.int32, shape, 0)
    valid = row_ids < full_rows
    if rem:  # static: only the partially-filled last row needs lane masking
        lane_ids = lax.broadcasted_iota(jnp.int32, shape, 1)
        valid = valid | ((row_ids == full_rows) & (lane_ids < rem))
    return valid


# ----------------------------------------------------------------------------
# Fused single-kernel path (input resident in VMEM).
# ----------------------------------------------------------------------------
def _fused_kernel(c_ref, x_ref, o_ref, *, n, mini, maxi, full_rows, rem, masked):
    # c_ref: SMEM f32[1] holding func(c).  x_ref/o_ref: whole slab in VMEM.
    x = x_ref[...]
    if masked:  # static flag: only emitted when a padded element tail exists
        valid = _valid_mask(x.shape, 0, full_rows, rem)
        xs = jnp.where(valid, x, 0.0)
    else:
        xs = x
    m = jnp.sum(xs) / n
    diff = x - m
    d2 = diff * diff
    if masked:
        d2 = jnp.where(valid, d2, 0.0)
        dmax = jnp.where(valid, diff, -jnp.inf)
    else:
        dmax = diff
    var = jnp.sum(d2) / (n - 1.0)               # unbiased, subtract-mean
    s = jnp.sqrt(jnp.maximum(var, 0.0))
    norm_max = jnp.max(dmax) / s                # == ((x - m) / s).max()
    th = jnp.maximum(m + jnp.clip(c_ref[0] * norm_max, mini, maxi) * s, 0.0)
    # relu(x-th)/d with d = ind where ind>0 else 1   ==  1[x > th]
    o_ref[...] = jnp.where(x > th, 1.0, 0.0).astype(o_ref.dtype)


# ----------------------------------------------------------------------------
# Streaming two-pass path (large inputs).
# ----------------------------------------------------------------------------
def _stats_kernel(x_ref, sum_ref, sq_ref, max_ref,
                  acc_sum, acc_sq, acc_max, *, tr, full_rows, rem, masked):
    i = pl.program_id(0)

    @pl.when(i == 0)
    def _():
        acc_sum[...] = jnp.zeros_like(acc_sum)
        acc_sq[...] = jnp.zeros_like(acc_sq)
        acc_max[...] = jnp.full_like(acc_max, -jnp.inf)

    x = x_ref[...]
    if masked:  # static: covers boundary-block garbage rows + element tail
        valid = _valid_mask(x.shape, i * tr, full_rows, rem)
        xs = jnp.where(valid, x, 0.0)
        xm = jnp.where(valid, x, -jnp.inf)
    else:
        xs = x
        xm = x

    # Lane-wise partials only (VPU add/max); cross-lane reduce happens once.
    acc_sum[...] = acc_sum[...] + jnp.sum(xs, axis=0, keepdims=True)
    acc_sq[...] = acc_sq[...] + jnp.sum(xs * xs, axis=0, keepdims=True)
    acc_max[...] = jnp.maximum(acc_max[...], jnp.max(xm, axis=0, keepdims=True))

    @pl.when(i == pl.num_programs(0) - 1)
    def _():
        sum_ref[...] = jnp.sum(acc_sum[...], keepdims=True)
        sq_ref[...] = jnp.sum(acc_sq[...], keepdims=True)
        max_ref[...] = jnp.max(acc_max[...], keepdims=True)


def _mask_kernel(th_ref, x_ref, o_ref):
    # th_ref: SMEM f32[1] with the precomputed threshold. Pure compare+select.
    o_ref[...] = jnp.where(x_ref[...] > th_ref[0], 1.0, 0.0).astype(o_ref.dtype)


# ----------------------------------------------------------------------------
# Wrapper.
# ----------------------------------------------------------------------------
def fft_th(psd, c=0.9, minmax=(-5.0, 5.0), func=lambda x: x):
    """JAX/Pallas equivalent of FFTTh.forward(PSD)."""
    orig_shape = psd.shape
    out_dtype = psd.dtype
    x32 = psd.astype(jnp.float32)
    total = x32.size
    rows = pl.cdiv(total, LANE)
    full_rows = total // LANE
    rem = total % LANE

    flat = x32.reshape(-1)
    if rem:  # pad the flat vector to a lane multiple; masked inside kernels
        flat = jnp.pad(flat, (0, rows * LANE - total))
    x2d = flat.reshape(rows, LANE)

    n = float(total)
    mini, maxi = float(minmax[0]), float(minmax[1])
    c_val = jnp.reshape(
        jnp.asarray(func(jnp.asarray(c, jnp.float32)), jnp.float32), (1,))

    # ---------------- fused path (data fits comfortably in VMEM) -------------
    if total * 4 <= _FUSE_MAX_BYTES:
        out2d = pl.pallas_call(
            functools.partial(_fused_kernel, n=n, mini=mini, maxi=maxi,
                              full_rows=full_rows, rem=rem, masked=bool(rem)),
            out_shape=jax.ShapeDtypeStruct((rows, LANE), jnp.float32),
            grid_spec=pl.GridSpec(
                grid=(1,),
                in_specs=[
                    pl.BlockSpec(memory_space=pltpu.MemorySpace.SMEM),
                    pl.BlockSpec((rows, LANE), lambda i: (0, 0)),
                ],
                out_specs=pl.BlockSpec((rows, LANE), lambda i: (0, 0)),
            ),
            compiler_params=pltpu.CompilerParams(
                dimension_semantics=("arbitrary",)),
        )(c_val, x2d)
        out_flat = out2d.reshape(-1)
        if rem:
            out_flat = out_flat[:total]
        return out_flat.reshape(orig_shape).astype(out_dtype)

    # ---------------- streaming two-pass path (large inputs) -----------------
    tr = _ROW_TILE
    n_blocks = pl.cdiv(rows, tr)
    masked = bool(rem) or (rows % tr != 0)

    # Pass 1: global reductions with lane-wise partial accumulators.
    s_sum, s_sq, s_max = pl.pallas_call(
        functools.partial(_stats_kernel, tr=tr, full_rows=full_rows,
                          rem=rem, masked=masked),
        out_shape=(
            jax.ShapeDtypeStruct((1, 1), jnp.float32),
            jax.ShapeDtypeStruct((1, 1), jnp.float32),
            jax.ShapeDtypeStruct((1, 1), jnp.float32),
        ),
        grid_spec=pltpu.PrefetchScalarGridSpec(
            num_scalar_prefetch=0,
            grid=(n_blocks,),
            in_specs=[pl.BlockSpec((tr, LANE), lambda i: (i, 0))],
            out_specs=(
                pl.BlockSpec((1, 1), lambda i: (0, 0)),
                pl.BlockSpec((1, 1), lambda i: (0, 0)),
                pl.BlockSpec((1, 1), lambda i: (0, 0)),
            ),
            scratch_shapes=[
                pltpu.VMEM((1, LANE), jnp.float32),
                pltpu.VMEM((1, LANE), jnp.float32),
                pltpu.VMEM((1, LANE), jnp.float32),
            ],
        ),
        compiler_params=pltpu.CompilerParams(
            dimension_semantics=("arbitrary",)),
    )(x2d)

    # Scalar threshold computed once in the glue (not per grid step).
    m = s_sum[0, 0] / n
    # single-pass variance; clamp guards against f32 cancellation going < 0
    var = jnp.maximum((s_sq[0, 0] - n * m * m) / (n - 1.0), 0.0)
    s = jnp.sqrt(var)
    norm_max = (s_max[0, 0] - m) / s
    th = jnp.maximum(m + jnp.clip(c_val[0] * norm_max, mini, maxi) * s, 0.0)
    th_arr = jnp.reshape(th, (1,)).astype(jnp.float32)

    # Pass 2: streaming compare+select. Boundary block writes are clamped by
    # the pipeline, so no pad/slice copies are needed.
    out2d = pl.pallas_call(
        _mask_kernel,
        out_shape=jax.ShapeDtypeStruct((rows, LANE), jnp.float32),
        grid_spec=pl.GridSpec(
            grid=(n_blocks,),
            in_specs=[
                pl.BlockSpec(memory_space=pltpu.MemorySpace.SMEM),
                pl.BlockSpec((tr, LANE), lambda i: (i, 0)),
            ],
            out_specs=pl.BlockSpec((tr, LANE), lambda i: (i, 0)),
        ),
        compiler_params=pltpu.CompilerParams(
            dimension_semantics=("parallel",)),
    )(th_arr, x2d)

    out_flat = out2d.reshape(-1)
    if rem:
        out_flat = out_flat[:total]
    return out_flat.reshape(orig_shape).astype(out_dtype)


# ----------------------------------------------------------------------------
# Pure-JAX reference + checking.
# ----------------------------------------------------------------------------
def fft_th_ref(psd, c=0.9, minmax=(-5.0, 5.0), func=lambda x: x):
    psd = psd.astype(jnp.float32)
    m = psd.mean()
    s = psd.std(ddof=1)
    norm_max = ((psd - m) / s).max()
    th = jnp.maximum(m + jnp.clip(func(jnp.float32(c)) * norm_max,
                                  minmax[0], minmax[1]) * s, 0.0)
    ind = jnp.maximum(psd - th, 0.0)
    d = jnp.where(ind > 0.0, ind, 1.0)
    return ind / d, th


def _check(x, out, ref, th_ref, atol=1e-5, band=1e-3):
    out_np, ref_np = np.asarray(out, np.float32), np.asarray(ref, np.float32)
    close = np.isclose(out_np, ref_np, atol=atol)
    # Result is a {0,1} mask; tolerate elements sitting essentially on the
    # threshold where tiny fp differences could flip them.
    borderline = np.abs(np.asarray(x, np.float32) - float(th_ref)) < band
    assert out.shape == x.shape
    assert np.all(close | borderline), "kernel/ref mismatch"


if __name__ == "__main__":
    key = jax.random.PRNGKey(0)
    k1, k2, k3 = jax.random.split(key, 3)

    # 1) Demo shape from the PyTorch module -> fused single-kernel path.
    x_small = jax.random.normal(k1, (2, 4, 16, 16), dtype=jnp.float32) * 2.0 + 1.0
    out_small = jax.block_until_ready(fft_th(x_small, c=0.9, minmax=(-5.0, 5.0)))
    ref_small, th_small = fft_th_ref(x_small, c=0.9, minmax=(-5.0, 5.0))
    _check(x_small, out_small, ref_small, th_small)

    # 2) Element count not divisible by 128 -> fused path with element mask.
    x_odd = jax.random.normal(k2, (3, 5, 7), dtype=jnp.float32) * 1.5 + 0.5
    out_odd = jax.block_until_ready(fft_th(x_odd, c=0.9, minmax=(-5.0, 5.0)))
    ref_odd, th_odd = fft_th_ref(x_odd, c=0.9, minmax=(-5.0, 5.0))
    _check(x_odd, out_odd, ref_odd, th_odd)

    # 3) Larger input -> streaming two-pass path with a ragged boundary block.
    x_big = jax.random.normal(k3, (5, 7, 128, 128), dtype=jnp.float32) * 2.0 + 1.0
    out_big = jax.block_until_ready(fft_th(x_big, c=0.9, minmax=(-5.0, 5.0)))
    ref_big, th_big = fft_th_ref(x_big, c=0.9, minmax=(-5.0, 5.0))
    _check(x_big, out_big, ref_big, th_big)

    print("KERNEL_OK")
</pallas_src>

<mosaic_0001>
module attributes {stable_mosaic.version = 11 : i64} {
  func.func @_fused_kernel(%arg0: i32, %arg1: memref<1xf32, #tpu.memory_space<smem>>, %arg2: memref<16x128xf32, #tpu.memory_space<vmem>>, %arg3: memref<16x128xf32, #tpu.memory_space<vmem>>) attributes {dimension_semantics = [#tpu.dimension_semantics<arbitrary>], iteration_bounds = array<i64: 1>, scalar_prefetch = 0 : i64, scratch_operands = 0 : i64, tpu.core_type = #tpu.core_type<tc>, window_params = [{transform_indices = @transform_0, window_bounds = array<i64: 1>}, {pipeline_mode = #tpu.pipeline_mode<synchronous>, transform_indices = @transform_1, window_bounds = array<i64: 16, 128>}, {pipeline_mode = #tpu.pipeline_mode<synchronous>, transform_indices = @transform_2, window_bounds = array<i64: 16, 128>}]} {
    %c0 = arith.constant 0 : index
    %c0_0 = arith.constant 0 : index
    %0 = vector.load %arg2[%c0, %c0_0] : memref<16x128xf32, #tpu.memory_space<vmem>>, vector<16x128xf32>
    %1 = vector.shape_cast %0 : vector<16x128xf32> to vector<1x16x128xf32>
    %cst = arith.constant dense<0.000000e+00> : vector<1xf32>
    %2 = vector.multi_reduction <add>, %1, %cst [1, 2] : vector<1x16x128xf32> to vector<1xf32>
    %3 = vector.shape_cast %2 : vector<1xf32> to vector<1x1x1xf32>
    %4 = vector.extract %3[0, 0, 0] : f32 from vector<1x1x1xf32>
    %cst_1 = arith.constant 2.048000e+03 : f32
    %5 = arith.divf %4, %cst_1 : f32
    %6 = vector.broadcast %5 : f32 to vector<16x128xf32>
    %7 = arith.subf %0, %6 : vector<16x128xf32>
    %8 = arith.mulf %7, %7 : vector<16x128xf32>
    %9 = vector.shape_cast %8 : vector<16x128xf32> to vector<1x16x128xf32>
    %cst_2 = arith.constant dense<0.000000e+00> : vector<1xf32>
    %10 = vector.multi_reduction <add>, %9, %cst_2 [1, 2] : vector<1x16x128xf32> to vector<1xf32>
    %11 = vector.shape_cast %10 : vector<1xf32> to vector<1x1x1xf32>
    %12 = vector.extract %11[0, 0, 0] : f32 from vector<1x1x1xf32>
    %cst_3 = arith.constant 2.047000e+03 : f32
    %13 = arith.divf %12, %cst_3 : f32
    %cst_4 = arith.constant 0.000000e+00 : f32
    %14 = arith.maximumf %13, %cst_4 : f32
    %15 = math.sqrt %14 : f32
    %16 = vector.shape_cast %7 : vector<16x128xf32> to vector<1x16x128xf32>
    %cst_5 = arith.constant dense<0xFF800000> : vector<1xf32>
    %17 = vector.multi_reduction <maximumf>, %16, %cst_5 [1, 2] : vector<1x16x128xf32> to vector<1xf32>
    %18 = vector.shape_cast %17 : vector<1xf32> to vector<1x1x1xf32>
    %19 = vector.extract %18[0, 0, 0] : f32 from vector<1x1x1xf32>
    %20 = arith.divf %19, %15 : f32
    %c0_6 = arith.constant 0 : index
    %21 = memref.load %arg1[%c0_6] : memref<1xf32, #tpu.memory_space<smem>>
    %22 = arith.mulf %21, %20 : f32
    %cst_7 = arith.constant -5.000000e+00 : f32
    %cst_8 = arith.constant 5.000000e+00 : f32
    %23 = arith.maximumf %cst_7, %22 : f32
    %24 = arith.minimumf %cst_8, %23 : f32
    %25 = arith.mulf %24, %15 : f32
    %26 = arith.addf %5, %25 : f32
    %cst_9 = arith.constant 0.000000e+00 : f32
    %27 = arith.maximumf %26, %cst_9 : f32
    %28 = vector.broadcast %27 : f32 to vector<16x128xf32>
    %29 = arith.cmpf ogt, %0, %28 : vector<16x128xf32>
    %cst_10 = arith.constant 1.000000e+00 : f32
    %cst_11 = arith.constant 0.000000e+00 : f32
    %30 = vector.broadcast %cst_10 : f32 to vector<16x128xf32>
    %31 = vector.broadcast %cst_11 : f32 to vector<16x128xf32>
    %32 = arith.select %29, %30, %31 : vector<16x128xi1>, vector<16x128xf32>
    %c0_12 = arith.constant 0 : index
    %c0_13 = arith.constant 0 : index
    %33 = vector.load %arg3[%c0_12, %c0_13] : memref<16x128xf32, #tpu.memory_space<vmem>>, vector<16x128xf32>
    tpu.vector_store %arg3[%c0_12, %c0_13], %32 {strides = array<i32>} : memref<16x128xf32, #tpu.memory_space<vmem>>, vector<16x128xf32>,
    return
  }
  func.func @transform_0(%arg0: i32) -> i32 {
    %c0_i32 = arith.constant 0 : i32
    %c0_i32_0 = arith.constant 0 : i32
    return %c0_i32 : i32
  }
  func.func @transform_1(%arg0: i32) -> (i32, i32) {
    %c0_i32 = arith.constant 0 : i32
    %c0_i32_0 = arith.constant 0 : i32
    %c0_i32_1 = arith.constant 0 : i32
    return %c0_i32, %c0_i32_0 : i32, i32
  }
  func.func @transform_2(%arg0: i32) -> (i32, i32) {
    %c0_i32 = arith.constant 0 : i32
    %c0_i32_0 = arith.constant 0 : i32
    %c0_i32_1 = arith.constant 0 : i32
    return %c0_i32, %c0_i32_0 : i32, i32
  }
}

</mosaic_0001>

<llo_original>
// kernel: tpu_custom_call.1
$region0: #{tpu_custom_call.1}
  #allocation0 [shape = 'u32[]', space=smem, size = 0x4, offset = 0x4, fixed_abs, tag = 'smem constant byte address 0x4 - core index']
  #allocation1 [shape = 'u32[144,128]{1,0:T(1,128)}', space=vmem, size = 0x12000, scoped, tag = 'internal scratch']
  #allocation2 [shape = 'f32[1]{0:T(128)S(6)}', space=smem, size = 0x200, scoped, tag = 'scoped memory for tpu_custom_call.1']
  %s0 = inlined_call_operand.<no memory space> [shape: f32[1], index: 0, kind: input, shape index: {}]
  %s1 = inlined_call_operand.hbm [shape: f32[16,128], index: 1, kind: input, shape index: {}]
  %s2 = inlined_call_operand.hbm [shape: f32[16,128], index: 2, kind: output, shape index: {}]
  %s3 = sld [smem:[#allocation0]]
  $region22: #{tpu_custom_call.1} parent=0
    _
  %s5 = ssub.s32 1, %s3
  %s6 = scalar_select 0, %s5, %s3
  %7 = sst [smem:[#allocation2]] %s0
  $region1: #{tpu_custom_call.1} parent=0
    #allocation3 [shape = 'u8[8192]{0}', space=vmem, size = 0x2000, scoped, tag = 'input window, operand 1, single buffered']
    #allocation4 [shape = 's32[1]{0}', space=sflag, size = 0x4, scoped, tag = 'scoped memory for tpu_custom_call.1']
    #allocation5 [shape = 's32[1]{0}', space=sflag, size = 0x4, scoped, tag = 'scoped memory for tpu_custom_call.1']
    #allocation6 [shape = 'u8[8192]{0}', space=vmem, size = 0x2000, scoped, tag = 'output window, operand 0, single buffered']
    %8 = vsyncpa [#allocation4], 0
    %9 = vsyncpa [#allocation5], 0
    // Predicated region
    $region2: #{tpu_custom_call.1} parent=1 // pred_check
      _
    $region3: #{tpu_custom_call.1} parent=1 // pred_check_branch
      %11 = sbr.rel (0) target = $region5
    $region4: #{tpu_custom_call.1} parent=1 // pred_region
      _
    $region5: #{tpu_custom_call.1} parent=1 // pred_fallthru
      _
    // Predicated region
    $region6: #{tpu_custom_call.1} parent=1 // pred_check
      _
    $region7: #{tpu_custom_call.1} parent=1 // pred_check_branch
      %13 = sbr.rel (0) target = $region9
    $region8: #{tpu_custom_call.1} parent=1 // pred_region
      %s15 = ssub.s32 256, 256
      %16 = vsyncadd [#allocation4], %s15
      %s17 = sshll.u32 [#allocation3], 4
      %s18 = int_to_ptr.vmem [resolvable:$true] %s17
      %23 = dma.hbm_to_vmem [thread:$0]  %s1, 256, %s18, [#allocation4], 128, 128, 8
    $region9: #{tpu_custom_call.1} parent=1 // pred_fallthru
      _
    // Predicated region
    $region10: #{tpu_custom_call.1} parent=1 // pred_check
      _
    $region11: #{tpu_custom_call.1} parent=1 // pred_check_branch
      %25 = sbr.rel (0) target = $region13
    $region12: #{tpu_custom_call.1} parent=1 // pred_region
      %26 = dma.done [#allocation4], 256
    $region13: #{tpu_custom_call.1} parent=1 // pred_fallthru
      _
    %v27 = vld [vmem:[#allocation3] sm:$0xff]
    %v28 = vld [vmem:[#allocation3 + $0x8] sm:$0xff]
    %v29 = vadd.f32 %v27, %v28
    %30 = vadd.xlane.f32.xlu0 %v29
    %v31 = vpop.xlane.xlu0 %30
    %v32 = vrot.slane %v31, 4
    %v33 = vadd.f32 %v31, %v32
    %v34 = vrot.slane %v33, 2
    %v35 = vadd.f32 %v33, %v34
    %v36 = vrot.slane %v35, 1
    %v37 = vadd.f32 %v35, %v36
    %s38 = vtos %v37
    %v39 = vrcp.pop 2048.0
    %s40 = vtos %v39
    %s41 = smul.f32 %s38, %s40
    %v42 = vstv %s41
    %v43 = vsub.f32 %v27, %v42
    %v44 = vsub.f32 %v28, %v42
    %v45 = vmul.f32 %v43, %v43
    %v46 = vmul.f32 %v44, %v44
    %v47 = vadd.f32 %v45, %v46
    %48 = vadd.xlane.f32.xlu0 %v47
    %v49 = vpop.xlane.xlu0 %48
    %v50 = vrot.slane %v49, 4
    %v51 = vadd.f32 %v49, %v50
    %v52 = vrot.slane %v51, 2
    %v53 = vadd.f32 %v51, %v52
    %v54 = vrot.slane %v53, 1
    %v55 = vadd.f32 %v53, %v54
    %s56 = vtos %v55
    %v57 = vrcp.pop 2047.0
    %s58 = vtos %v57
    %s59 = smul.f32 %s56, %s58
    %s60 = smax.f32 %s59, 0.0
    %v61 = vstv %s60
    %v62 = vrsqrt.pop %v61
    %v63 = vmul.f32 %v61, %v62
    %vm64 = vcmp.eq.f32.partialorder %v61, inf
    %v65 = vsel %vm64, %v61, %v63
    %vm66 = vcmp.eq.f32.partialorder %v61, 0.0
    %v67 = vand.u32 %v61, 2147483648
    %v68 = vsel %vm66, %v67, %v65
    %s69 = vtos %v68
    %v70 = vmax.f32 %v43, %v44
    %71 = vmax.xlane.f32.xlu0 %v70
    %v72 = vpop.xlane.xlu0 %71
    %v73 = vrot.slane %v72, 4
    %v74 = vmax.f32 %v72, %v73
    %v75 = vrot.slane %v74, 2
    %v76 = vmax.f32 %v74, %v75
    %v77 = vrot.slane %v76, 1
    %v78 = vmax.f32 %v76, %v77
    %s79 = vtos %v78
    %v80 = vstv %s69
    %v81 = vrcp.pop %v80
    %s82 = vtos %v81
    %s83 = smul.f32 %s79, %s82
    %s84 = sld [smem:[#allocation2]]
    %s85 = smul.f32 %s84, %s83
    %s86 = smax.f32 %s85, -5.0
    %s87 = smin.f32 %s86, 5.0
    %s88 = smul.f32 %s87, %s69
    %s89 = sadd.f32 %s41, %s88
    %s90 = smax.f32 %s89, 0.0
    %v91 = vstv %s90
    %vm92 = vcmp.gt.f32.partialorder %v27, %v91
    %vm93 = vcmp.gt.f32.partialorder %v28, %v91
    %v94 = vsel %vm92, 1.0, 0.0
    %v95 = vsel %vm93, 1.0, 0.0
    %96 = vst [vmem:[#allocation6] sm:$0xff] %v94
    %97 = vst [vmem:[#allocation6 + $0x8] sm:$0xff] %v95
    // Predicated region
    $region14: #{tpu_custom_call.1} parent=1 // pred_check
      _
    $region15: #{tpu_custom_call.1} parent=1 // pred_check_branch
      %99 = sbr.rel (0) target = $region17
    $region16: #{tpu_custom_call.1} parent=1 // pred_region
      %s101 = ssub.s32 256, 256
      %102 = vsyncadd [#allocation5], %s101
      %s103 = sshll.u32 [#allocation6], 4
      %s104 = int_to_ptr.vmem [resolvable:$true] %s103
      %109 = dma.vmem_to_hbm [thread:$0]  %s104, 256, %s2, [#allocation5], 128, 128, 8
    $region17: #{tpu_custom_call.1} parent=1 // pred_fallthru
      _
    // Predicated region
    $region18: #{tpu_custom_call.1} parent=1 // pred_check
      _
    $region19: #{tpu_custom_call.1} parent=1 // pred_check_branch
      %111 = sbr.rel (0) target = $region21
    $region20: #{tpu_custom_call.1} parent=1 // pred_region
      %112 = dma.done [#allocation5], 256
    $region21: #{tpu_custom_call.1} parent=1 // pred_fallthru
      _
    %113 = vsyncpa [#allocation4], 1
    %114 = vsyncpa [#allocation5], 1

</llo_original>
